<compile_context>
chip_gen: v5e
topology: v5e:2x2
jax: 0.10.0
libtpu: 0.0.40
codegen_flags: <defaults>
</compile_context>

<pallas_src>
import jax
import jax.numpy as jnp
from jax.experimental import pallas as pl
from jax.experimental.pallas import tpu as pltpu

INPUT_SIZE = 2 * 334      # 668 (full-dim block; exempt from 128-lane rule)
HIDDEN = 256
NUM_ACTIONS = 60
N_PAD = 128               # 60 padded up to the lane width
TILE_M_SINGLE = 8         # sublane-aligned row count for the single-sample path


def playnet_kernel(x_ref, w1_ref, b1_ref, w2_ref, b2_ref, o_ref):
    """One tile of rows through fc1 -> ReLU -> fc2 -> softmax.

    x_ref : (M, 668)     bf16
    w1_ref: (668, 256)   bf16
    b1_ref: (1, 256)     f32
    w2_ref: (256, 128)   bf16 (cols >= 60 are exactly zero)
    b2_ref: (1, 128)     f32  (lanes >= 60 hold -1e30 -> masked softmax lanes)
    o_ref : (M, 128)     f32  (cols >= 60 hold 0 probability)
    """
    # fc1 + ReLU (bf16 MXU matmul, f32 accumulate; epilogue in f32)
    h = jnp.dot(x_ref[...], w1_ref[...],
                preferred_element_type=jnp.float32) + b1_ref[...]
    h = jnp.maximum(h, 0.0)

    # fc2 (padded lanes: h @ 0 + (-1e30) -> exp() == 0, no explicit mask needed)
    logits = jnp.dot(h.astype(jnp.bfloat16), w2_ref[...],
                     preferred_element_type=jnp.float32) + b2_ref[...]

    # numerically stable softmax along the lane axis
    m = jnp.max(logits, axis=-1, keepdims=True)
    e = jnp.exp(logits - m)
    denom = jnp.sum(e, axis=-1, keepdims=True)
    o_ref[...] = (e * pl.reciprocal(denom, approx=False)).astype(o_ref.dtype)


def prepare_params(w1, b1, w2, b2):
    """Weights -> bf16 (fc2 padded to 128 cols), biases f32, mask baked into b2.

    w1: (668, 256), b1: (256,), w2: (256, 60), b2: (60,)   [(in, out) layout]
    """
    w1p = w1.astype(jnp.bfloat16)                                  # (668, 256)
    b1p = jnp.reshape(b1, (1, HIDDEN)).astype(jnp.float32)         # (1, 256)
    w2p = jnp.zeros((HIDDEN, N_PAD), jnp.bfloat16)
    w2p = w2p.at[:, :NUM_ACTIONS].set(w2.astype(jnp.bfloat16))     # (256, 128)
    b2p = jnp.full((1, N_PAD), -1e30, jnp.float32)
    b2p = b2p.at[0, :NUM_ACTIONS].set(b2.astype(jnp.float32))      # (1, 128)
    return w1p, b1p, w2p, b2p


def playnet_forward(x, params):
    """Single-sample forward (matches the PyTorch module: flatten -> (60,)).

    No grid: whole arrays sit in VMEM; no pipeline bookkeeping for a 0.2 MFLOP call.
    """
    w1, b1, w2, b2 = params
    x_flat = jnp.reshape(x, (1, -1)).astype(jnp.bfloat16)          # (1, 668) bf16
    x_pad = jnp.pad(x_flat, ((0, TILE_M_SINGLE - 1), (0, 0)))      # (8, 668)

    out = pl.pallas_call(
        playnet_kernel,
        out_shape=jax.ShapeDtypeStruct((TILE_M_SINGLE, N_PAD), jnp.float32),
    )(x_pad, w1, b1, w2, b2)

    return out[0, :NUM_ACTIONS]


def playnet_forward_batched(x_batch, params, tile_m=128):
    """Batched forward: (B, ...) -> (B, 60).

    Grid over batch tiles; weight/bias BlockSpecs always return block (0, 0) so
    they stay VMEM-resident across the whole grid; batch axis is "parallel"
    (keep >= 2 tiles so both TensorCores get work on megacore parts).
    """
    w1, b1, w2, b2 = params
    B = x_batch.shape[0]
    x2 = jnp.reshape(x_batch, (B, -1)).astype(jnp.bfloat16)        # one fused cast
    b_pad = ((B + tile_m - 1) // tile_m) * tile_m
    if b_pad != B:
        x2 = jnp.pad(x2, ((0, b_pad - B), (0, 0)))

    out = pl.pallas_call(
        playnet_kernel,
        out_shape=jax.ShapeDtypeStruct((b_pad, N_PAD), jnp.float32),
        grid=(b_pad // tile_m,),
        in_specs=[
            pl.BlockSpec((tile_m, INPUT_SIZE), lambda i: (i, 0)),
            pl.BlockSpec((INPUT_SIZE, HIDDEN), lambda i: (0, 0)),
            pl.BlockSpec((1, HIDDEN), lambda i: (0, 0)),
            pl.BlockSpec((HIDDEN, N_PAD), lambda i: (0, 0)),
            pl.BlockSpec((1, N_PAD), lambda i: (0, 0)),
        ],
        out_specs=pl.BlockSpec((tile_m, N_PAD), lambda i: (i, 0)),
        compiler_params=pltpu.CompilerParams(
            dimension_semantics=("parallel",)),
    )(x2, w1, b1, w2, b2)

    return out[:B, :NUM_ACTIONS]


def init_params(key):
    """PyTorch-default-style init: U(-1/sqrt(fan_in), 1/sqrt(fan_in)), (in, out) layout."""
    k1, k2, k3, k4 = jax.random.split(key, 4)
    bound1 = 1.0 / jnp.sqrt(jnp.float32(INPUT_SIZE))
    bound2 = 1.0 / jnp.sqrt(jnp.float32(HIDDEN))
    w1 = jax.random.uniform(k1, (INPUT_SIZE, HIDDEN), jnp.float32, -bound1, bound1)
    b1 = jax.random.uniform(k2, (HIDDEN,), jnp.float32, -bound1, bound1)
    w2 = jax.random.uniform(k3, (HIDDEN, NUM_ACTIONS), jnp.float32, -bound2, bound2)
    b2 = jax.random.uniform(k4, (NUM_ACTIONS,), jnp.float32, -bound2, bound2)
    return w1, b1, w2, b2


def reference_forward(x, params):
    """Pure-JAX reference mirroring the kernel math (bf16 matmuls, f32 accumulate)."""
    w1, b1, w2, b2 = params
    x_flat = jnp.reshape(x, (-1,)).astype(jnp.bfloat16)
    h = jnp.maximum(
        jnp.dot(x_flat, w1, preferred_element_type=jnp.float32) + b1[0], 0.0)
    logits = jnp.dot(h.astype(jnp.bfloat16), w2,
                     preferred_element_type=jnp.float32) + b2[0]
    return jax.nn.softmax(logits[:NUM_ACTIONS], axis=-1)


def reference_forward_batched(x_batch, params):
    w1, b1, w2, b2 = params
    B = x_batch.shape[0]
    x2 = jnp.reshape(x_batch, (B, -1)).astype(jnp.bfloat16)
    h = jnp.maximum(
        jnp.dot(x2, w1, preferred_element_type=jnp.float32) + b1, 0.0)
    logits = jnp.dot(h.astype(jnp.bfloat16), w2,
                     preferred_element_type=jnp.float32) + b2
    return jax.nn.softmax(logits[:, :NUM_ACTIONS], axis=-1)


if __name__ == "__main__":
    key = jax.random.PRNGKey(0)
    kx, kb, kp = jax.random.split(key, 3)

    raw = init_params(kp)
    params = prepare_params(*raw)

    # --- single-sample path (module semantics: flatten everything -> (60,)) ---
    x = jax.random.normal(kx, (2, 334), dtype=jnp.float32)
    out = jax.block_until_ready(playnet_forward(x, params))
    ref = reference_forward(x, params)
    assert out.shape == (NUM_ACTIONS,)
    assert jnp.allclose(jnp.sum(out), 1.0, atol=1e-3)
    assert jnp.allclose(out, ref, atol=2e-3)

    # --- batched path (amortizes weight DMA, fills the MXU; 2 tiles -> both v7x TCs) ---
    B = 256
    x_batch = jax.random.normal(kb, (B, 2, 334), dtype=jnp.float32)
    out_b = jax.block_until_ready(playnet_forward_batched(x_batch, params, tile_m=128))
    ref_b = reference_forward_batched(x_batch, params)
    assert out_b.shape == (B, NUM_ACTIONS)
    assert jnp.allclose(jnp.sum(out_b, axis=-1), 1.0, atol=1e-3)
    assert jnp.allclose(out_b, ref_b, atol=2e-3)

    print("KERNEL_OK")
</pallas_src>

<mosaic_0001>
module attributes {stable_mosaic.version = 11 : i64} {
  func.func @playnet_kernel(%arg0: memref<8x668xbf16, #tpu.memory_space<vmem>>, %arg1: memref<668x256xbf16, #tpu.memory_space<vmem>>, %arg2: memref<1x256xf32, #tpu.memory_space<vmem>>, %arg3: memref<256x128xbf16, #tpu.memory_space<vmem>>, %arg4: memref<1x128xf32, #tpu.memory_space<vmem>>, %arg5: memref<8x128xf32, #tpu.memory_space<vmem>>) attributes {dimension_semantics = [], scalar_prefetch = 0 : i64, scratch_operands = 0 : i64, tpu.core_type = #tpu.core_type<tc>} {
    %c0 = arith.constant 0 : index
    %c0_0 = arith.constant 0 : index
    %0 = vector.load %arg0[%c0, %c0_0] : memref<8x668xbf16, #tpu.memory_space<vmem>>, vector<8x668xbf16>
    %c0_1 = arith.constant 0 : index
    %c0_2 = arith.constant 0 : index
    %1 = vector.load %arg1[%c0_1, %c0_2] : memref<668x256xbf16, #tpu.memory_space<vmem>>, vector<668x256xbf16>
    %cst = arith.constant dense<0.000000e+00> : vector<8x256xf32>
    %2 = tpu.matmul %0, %1, %cst {dimension_numbers = #tpu.dot_dimension_numbers<[1], [0], [0], [1], [0, 0, 1, 1], [], []>} : vector<8x668xbf16>, vector<668x256xbf16>, vector<8x256xf32> -> vector<8x256xf32>
    %c0_3 = arith.constant 0 : index
    %c0_4 = arith.constant 0 : index
    %3 = vector.load %arg2[%c0_3, %c0_4] : memref<1x256xf32, #tpu.memory_space<vmem>>, vector<1x256xf32>
    %4 = vector.broadcast %3 : vector<1x256xf32> to vector<8x256xf32>
    %5 = arith.addf %2, %4 : vector<8x256xf32>
    %cst_5 = arith.constant 0.000000e+00 : f32
    %6 = vector.broadcast %cst_5 : f32 to vector<8x256xf32>
    %7 = arith.maximumf %5, %6 : vector<8x256xf32>
    %8 = arith.truncf %7 : vector<8x256xf32> to vector<8x256xbf16>
    %c0_6 = arith.constant 0 : index
    %c0_7 = arith.constant 0 : index
    %9 = vector.load %arg3[%c0_6, %c0_7] : memref<256x128xbf16, #tpu.memory_space<vmem>>, vector<256x128xbf16>
    %cst_8 = arith.constant dense<0.000000e+00> : vector<8x128xf32>
    %10 = tpu.matmul %8, %9, %cst_8 {dimension_numbers = #tpu.dot_dimension_numbers<[1], [0], [0], [1], [0, 0, 1, 1], [], []>} : vector<8x256xbf16>, vector<256x128xbf16>, vector<8x128xf32> -> vector<8x128xf32>
    %c0_9 = arith.constant 0 : index
    %c0_10 = arith.constant 0 : index
    %11 = vector.load %arg4[%c0_9, %c0_10] : memref<1x128xf32, #tpu.memory_space<vmem>>, vector<1x128xf32>
    %12 = vector.broadcast %11 : vector<1x128xf32> to vector<8x128xf32>
    %13 = arith.addf %10, %12 : vector<8x128xf32>
    %cst_11 = arith.constant dense<0xFF800000> : vector<8xf32>
    %14 = vector.multi_reduction <maximumf>, %13, %cst_11 [1] : vector<8x128xf32> to vector<8xf32>
    %15 = vector.shape_cast %14 : vector<8xf32> to vector<8x1xf32>
    %16 = vector.broadcast %15 : vector<8x1xf32> to vector<8x128xf32>
    %17 = arith.subf %13, %16 : vector<8x128xf32>
    %18 = math.exp %17 : vector<8x128xf32>
    %cst_12 = arith.constant dense<0.000000e+00> : vector<8xf32>
    %19 = vector.multi_reduction <add>, %18, %cst_12 [1] : vector<8x128xf32> to vector<8xf32>
    %20 = vector.shape_cast %19 : vector<8xf32> to vector<8x1xf32>
    %21 = tpu.reciprocal %20 : vector<8x1xf32> -> vector<8x1xf32>
    %22 = vector.broadcast %21 : vector<8x1xf32> to vector<8x128xf32>
    %23 = arith.mulf %18, %22 : vector<8x128xf32>
    %c0_13 = arith.constant 0 : index
    %c0_14 = arith.constant 0 : index
    %24 = vector.load %arg5[%c0_13, %c0_14] : memref<8x128xf32, #tpu.memory_space<vmem>>, vector<8x128xf32>
    tpu.vector_store %arg5[%c0_13, %c0_14], %23 {strides = array<i32>} : memref<8x128xf32, #tpu.memory_space<vmem>>, vector<8x128xf32>,
    return
  }
}

</mosaic_0001>

<llo_original>
// kernel: tpu_custom_call.1
$region0: #{tpu_custom_call.1}
  #allocation0 [shape = 'u32[]', space=smem, size = 0x4, offset = 0x4, fixed_abs, tag = 'smem constant byte address 0x4 - core index']
  #allocation1 [shape = 'u32[72,128]{1,0:T(1,128)}', space=vmem, size = 0x9000, scoped, tag = 'internal scratch']
  %s0 = inlined_call_operand.hbm [shape: bf16[8,668], index: 0, kind: input, shape index: {}]
  %s1 = inlined_call_operand.hbm [shape: bf16[668,256], index: 1, kind: input, shape index: {}]
  %s2 = inlined_call_operand.hbm [shape: f32[1,256], index: 2, kind: input, shape index: {}]
  %s3 = inlined_call_operand.hbm [shape: bf16[256,128], index: 3, kind: input, shape index: {}]
  %s4 = inlined_call_operand.vmem [shape: f32[1,128], index: 4, kind: input, shape index: {}]
  %s5 = inlined_call_operand.hbm [shape: f32[8,128], index: 5, kind: output, shape index: {}]
  %s6 = sld [smem:[#allocation0]]
  $region46: #{tpu_custom_call.1} parent=0
    _
  %s8 = ssub.s32 1, %s6
  %s9 = scalar_select 0, %s8, %s6
  $region1: #{tpu_custom_call.1} parent=0
    #allocation2 [shape = 'u8[12288]{0}', space=vmem, size = 0x3000, scoped, tag = 'input window, operand 0, single buffered']
    #allocation3 [shape = 's32[1]{0}', space=sflag, size = 0x4, scoped, tag = 'scoped memory for tpu_custom_call.1']
    #allocation4 [shape = 's32[1]{0}', space=sflag, size = 0x4, scoped, tag = 'scoped memory for tpu_custom_call.1']
    #allocation5 [shape = 'u8[344064]{0}', space=vmem, size = 0x54000, scoped, tag = 'input window, operand 1, single buffered']
    #allocation6 [shape = 's32[1]{0}', space=sflag, size = 0x4, scoped, tag = 'scoped memory for tpu_custom_call.1']
    #allocation7 [shape = 'u8[1024]{0}', space=vmem, size = 0x400, scoped, tag = 'input window, operand 2, single buffered']
    #allocation8 [shape = 'u8[65536]{0}', space=vmem, size = 0x10000, scoped, tag = 'input window, operand 3, single buffered']
    #allocation9 [shape = 's32[1]{0}', space=sflag, size = 0x4, scoped, tag = 'scoped memory for tpu_custom_call.1']
    #allocation10 [shape = 'u8[4096]{0}', space=vmem, size = 0x1000, scoped, tag = 'output window, operand 0, single buffered']
    %10 = vsyncpa [#allocation3], 0
    %11 = vsyncpa [#allocation6], 0
    %12 = vsyncpa [#allocation9], 0
    %13 = vsyncpa [#allocation4], 0
    // Predicated region
    $region2: #{tpu_custom_call.1} parent=1 // pred_check
      _
    $region3: #{tpu_custom_call.1} parent=1 // pred_check_branch
      %15 = sbr.rel (0) target = $region5
    $region4: #{tpu_custom_call.1} parent=1 // pred_region
      %17 = vsyncadd [#allocation3], 0
      %s19 = sshll.u32 %s0, 4
      %s20 = int_to_ptr.hbm [resolvable:$true] %s19
      %s21 = sshll.u32 [#allocation2], 4
      %s22 = int_to_ptr.vmem [resolvable:$true] %s21
      %24 = dma.hbm_to_vmem [thread:$0]  %s20, 384, %s22, [#allocation3]
    $region5: #{tpu_custom_call.1} parent=1 // pred_fallthru
      _
    // Predicated region
    $region6: #{tpu_custom_call.1} parent=1 // pred_check
      _
    $region7: #{tpu_custom_call.1} parent=1 // pred_check_branch
      %26 = sbr.rel (0) target = $region9
    $region8: #{tpu_custom_call.1} parent=1 // pred_region
      %28 = vsyncadd [#allocation6], 0
      %s29 = sshll.u32 %s1, 4
      %s30 = int_to_ptr.hbm [resolvable:$true] %s29
      %s31 = sshll.u32 [#allocation5], 4
      %s32 = int_to_ptr.vmem [resolvable:$true] %s31
      %37 = dma.hbm_to_vmem [thread:$0]  %s30, 10752, %s32, [#allocation6], 128, 128, 8
    $region9: #{tpu_custom_call.1} parent=1 // pred_fallthru
      _
    // Predicated region
    $region10: #{tpu_custom_call.1} parent=1 // pred_check
      _
    $region11: #{tpu_custom_call.1} parent=1 // pred_check_branch
      %39 = sbr.rel (0) target = $region13
    $region12: #{tpu_custom_call.1} parent=1 // pred_region
      %41 = vsyncadd [#allocation6], 0
      %s43 = sshll.u32 %s2, 4
      %s44 = int_to_ptr.hbm [resolvable:$true] %s43
      %s45 = sshll.u32 [#allocation7], 4
      %s46 = int_to_ptr.vmem [resolvable:$true] %s45
      %48 = dma.hbm_to_vmem [thread:$0]  %s44, 32, %s46, [#allocation6]
    $region13: #{tpu_custom_call.1} parent=1 // pred_fallthru
      _
    // Predicated region
    $region14: #{tpu_custom_call.1} parent=1 // pred_check
      _
    $region15: #{tpu_custom_call.1} parent=1 // pred_check_branch
      %50 = sbr.rel (0) target = $region17
    $region16: #{tpu_custom_call.1} parent=1 // pred_region
      %52 = vsyncadd [#allocation9], 0
      %s53 = sshll.u32 %s3, 4
      %s54 = int_to_ptr.hbm [resolvable:$true] %s53
      %s55 = sshll.u32 [#allocation8], 4
      %s56 = int_to_ptr.vmem [resolvable:$true] %s55
      %61 = dma.hbm_to_vmem [thread:$0]  %s54, 2048, %s56, [#allocation9], 64, 64, 4
    $region17: #{tpu_custom_call.1} parent=1 // pred_fallthru
      _
    // Predicated region
    $region18: #{tpu_custom_call.1} parent=1 // pred_check
      _
    $region19: #{tpu_custom_call.1} parent=1 // pred_check_branch
      %63 = sbr.rel (0) target = $region21
    $region20: #{tpu_custom_call.1} parent=1 // pred_region
      _
    $region21: #{tpu_custom_call.1} parent=1 // pred_fallthru
      _
    // Predicated region
    $region22: #{tpu_custom_call.1} parent=1 // pred_check
      _
    $region23: #{tpu_custom_call.1} parent=1 // pred_check_branch
      %65 = sbr.rel (0) target = $region25
    $region24: #{tpu_custom_call.1} parent=1 // pred_region
      %67 = dma.done [#allocation3], 384
    $region25: #{tpu_custom_call.1} parent=1 // pred_fallthru
      _
    // Predicated region
    $region26: #{tpu_custom_call.1} parent=1 // pred_check
      _
    $region27: #{tpu_custom_call.1} parent=1 // pred_check_branch
      %69 = sbr.rel (0) target = $region29
    $region28: #{tpu_custom_call.1} parent=1 // pred_region
      %71 = dma.done [#allocation6], 10752
    $region29: #{tpu_custom_call.1} parent=1 // pred_fallthru
      _
    // Predicated region
    $region30: #{tpu_custom_call.1} parent=1 // pred_check
      _
    $region31: #{tpu_custom_call.1} parent=1 // pred_check_branch
      %73 = sbr.rel (0) target = $region33
    $region32: #{tpu_custom_call.1} parent=1 // pred_region
      %75 = dma.done [#allocation6], 32
    $region33: #{tpu_custom_call.1} parent=1 // pred_fallthru
      _
    // Predicated region
    $region34: #{tpu_custom_call.1} parent=1 // pred_check
      _
    $region35: #{tpu_custom_call.1} parent=1 // pred_check_branch
      %77 = sbr.rel (0) target = $region37
    $region36: #{tpu_custom_call.1} parent=1 // pred_region
      %79 = dma.done [#allocation9], 2048
    $region37: #{tpu_custom_call.1} parent=1 // pred_fallthru
      _
    %v81 = vld [vmem:[#allocation2] sm:$0xff]
    %v82 = vld [vmem:[#allocation2 + $0x8] sm:$0xff]
    %v83 = vld [vmem:[#allocation2 + $0x10] sm:$0xff]
    %v84 = vld [vmem:[#allocation5] sm:$0xff]
    %v85 = vld [vmem:[#allocation5 + $0x8] sm:$0xff]
    %v86 = vld [vmem:[#allocation5 + $0x10] sm:$0xff]
    %v87 = vld [vmem:[#allocation5 + $0x18] sm:$0xff]
    %v88 = vld [vmem:[#allocation5 + $0x20] sm:$0xff]
    %v89 = vld [vmem:[#allocation5 + $0x28] sm:$0xff]
    %v90 = vld [vmem:[#allocation5 + $0x30] sm:$0xff]
    %v91 = vld [vmem:[#allocation5 + $0x38] sm:$0xff]
    %v92 = vld [vmem:[#allocation5 + $0x40] sm:$0xff]
    %v93 = vld [vmem:[#allocation5 + $0x48] sm:$0xff]
    %v94 = vld [vmem:[#allocation5 + $0x50] sm:$0xff]
    %v95 = vld [vmem:[#allocation5 + $0x58] sm:$0xff]
    %v96 = vld [vmem:[#allocation5 + $0x60] sm:$0xff]
    %v97 = vld [vmem:[#allocation5 + $0x68] sm:$0xff]
    %v98 = vld [vmem:[#allocation5 + $0x70] sm:$0xff]
    %v99 = vld [vmem:[#allocation5 + $0x78] sm:$0xff]
    %v100 = vld [vmem:[#allocation5 + $0x80] sm:$0xff]
    %v101 = vld [vmem:[#allocation5 + $0x88] sm:$0xff]
    %v102 = vld [vmem:[#allocation5 + $0x90] sm:$0xff]
    %v103 = vld [vmem:[#allocation5 + $0x98] sm:$0xff]
    %v104 = vld [vmem:[#allocation5 + $0xa0] sm:$0xff]
    %v105 = vld [vmem:[#allocation5 + $0xa8] sm:$0xff]
    %v106 = vld [vmem:[#allocation5 + $0xb0] sm:$0xff]
    %v107 = vld [vmem:[#allocation5 + $0xb8] sm:$0xff]
    %v108 = vld [vmem:[#allocation5 + $0xc0] sm:$0xff]
    %v109 = vld [vmem:[#allocation5 + $0xc8] sm:$0xff]
    %v110 = vld [vmem:[#allocation5 + $0xd0] sm:$0xff]
    %v111 = vld [vmem:[#allocation5 + $0xd8] sm:$0xff]
    %v112 = vld [vmem:[#allocation5 + $0xe0] sm:$0xff]
    %v113 = vld [vmem:[#allocation5 + $0xe8] sm:$0xff]
    %v114 = vld [vmem:[#allocation5 + $0xf0] sm:$0xff]
    %v115 = vld [vmem:[#allocation5 + $0xf8] sm:$0xff]
    %v116 = vld [vmem:[#allocation5 + $0x100] sm:$0xff]
    %v117 = vld [vmem:[#allocation5 + $0x108] sm:$0xff]
    %v118 = vld [vmem:[#allocation5 + $0x110] sm:$0xff]
    %v119 = vld [vmem:[#allocation5 + $0x118] sm:$0xff]
    %v120 = vld [vmem:[#allocation5 + $0x120] sm:$0xff]
    %v121 = vld [vmem:[#allocation5 + $0x128] sm:$0xff]
    %v122 = vld [vmem:[#allocation5 + $0x130] sm:$0xff]
    %v123 = vld [vmem:[#allocation5 + $0x138] sm:$0xff]
    %v124 = vld [vmem:[#allocation5 + $0x140] sm:$0xff]
    %v125 = vld [vmem:[#allocation5 + $0x148] sm:$0xff]
    %v126 = vld [vmem:[#allocation5 + $0x150] sm:$0xff]
    %v127 = vld [vmem:[#allocation5 + $0x158] sm:$0xff]
    %v128 = vld [vmem:[#allocation5 + $0x160] sm:$0xff]
    %v129 = vld [vmem:[#allocation5 + $0x168] sm:$0xff]
    %v130 = vld [vmem:[#allocation5 + $0x170] sm:$0xff]
    %v131 = vld [vmem:[#allocation5 + $0x178] sm:$0xff]
    %v132 = vld [vmem:[#allocation5 + $0x180] sm:$0xff]
    %v133 = vld [vmem:[#allocation5 + $0x188] sm:$0xff]
    %v134 = vld [vmem:[#allocation5 + $0x190] sm:$0xff]
    %v135 = vld [vmem:[#allocation5 + $0x198] sm:$0xff]
    %v136 = vld [vmem:[#allocation5 + $0x1a0] sm:$0xff]
    %v137 = vld [vmem:[#allocation5 + $0x1a8] sm:$0xff]
    %v138 = vld [vmem:[#allocation5 + $0x1b0] sm:$0xff]
    %v139 = vld [vmem:[#allocation5 + $0x1b8] sm:$0xff]
    %v140 = vld [vmem:[#allocation5 + $0x1c0] sm:$0xff]
    %v141 = vld [vmem:[#allocation5 + $0x1c8] sm:$0xff]
    %v142 = vld [vmem:[#allocation5 + $0x1d0] sm:$0xff]
    %v143 = vld [vmem:[#allocation5 + $0x1d8] sm:$0xff]
    %v144 = vld [vmem:[#allocation5 + $0x1e0] sm:$0xff]
    %v145 = vld [vmem:[#allocation5 + $0x1e8] sm:$0xff]
    %v146 = vld [vmem:[#allocation5 + $0x1f0] sm:$0xff]
    %v147 = vld [vmem:[#allocation5 + $0x1f8] sm:$0xff]
    %v148 = vld [vmem:[#allocation5 + $0x200] sm:$0xff]
    %v149 = vld [vmem:[#allocation5 + $0x208] sm:$0xff]
    %v150 = vld [vmem:[#allocation5 + $0x210] sm:$0xff]
    %v151 = vld [vmem:[#allocation5 + $0x218] sm:$0xff]
    %v152 = vld [vmem:[#allocation5 + $0x220] sm:$0xff]
    %v153 = vld [vmem:[#allocation5 + $0x228] sm:$0xff]
    %v154 = vld [vmem:[#allocation5 + $0x230] sm:$0xff]
    %v155 = vld [vmem:[#allocation5 + $0x238] sm:$0xff]
    %v156 = vld [vmem:[#allocation5 + $0x240] sm:$0xff]
    %v157 = vld [vmem:[#allocation5 + $0x248] sm:$0xff]
    %v158 = vld [vmem:[#allocation5 + $0x250] sm:$0xff]
    %v159 = vld [vmem:[#allocation5 + $0x258] sm:$0xff]
    %v160 = vld [vmem:[#allocation5 + $0x260] sm:$0xff]
    %v161 = vld [vmem:[#allocation5 + $0x268] sm:$0xff]
    %v162 = vld [vmem:[#allocation5 + $0x270] sm:$0xff]
    %v163 = vld [vmem:[#allocation5 + $0x278] sm:$0xff]
    %v164 = vld [vmem:[#allocation5 + $0x280] sm:$0xff]
    %v165 = vld [vmem:[#allocation5 + $0x288] sm:$0xff]
    %v166 = vld [vmem:[#allocation5 + $0x290] sm:$0xff]
    %v167 = vld [vmem:[#allocation5 + $0x298] sm:$0x33]
    %v168 = vld [vmem:[#allocation7] sm:$0x3]
    %v170 = vperm.slane %v168, 0
    %v171 = vperm.slane %v168, 1
    %v177 = vunpack.c.l.b16 %v81
    %v178 = vunpack.c.h.b16 %v81
    %v179 = vunpack.c.l.b16 %v82
    %v180 = vunpack.c.h.b16 %v82
    %v181 = vunpack.c.l.b16 %v83
    %v182 = vunpack.c.h.b16 %v83
    %v183 = vpack.c.b16 %v177, %v177
    %v184 = vpack.c.b16 %v178, %v178
    %v185 = vpack.c.b16 %v179, %v179
    %v186 = vpack.c.b16 %v180, %v180
    %v187 = vpack.c.b16 %v181, %v181
    %v188 = vpack.c.b16 %v182, %v182
    %v278 = vunpack.c.l.b16 %v84
    %v279 = vunpack.c.h.b16 %v84
    %v280 = vunpack.c.l.b16 %v85
    %v281 = vunpack.c.h.b16 %v85
    %v282 = vunpack.c.l.b16 %v86
    %v283 = vunpack.c.h.b16 %v86
    %v284 = vunpack.c.l.b16 %v87
    %v285 = vunpack.c.h.b16 %v87
    %v286 = vunpack.c.l.b16 %v88
    %v287 = vunpack.c.h.b16 %v88
    %v288 = vunpack.c.l.b16 %v89
    %v289 = vunpack.c.h.b16 %v89
    %v290 = vunpack.c.l.b16 %v90
    %v291 = vunpack.c.h.b16 %v90
    %v292 = vunpack.c.l.b16 %v91
    %v293 = vunpack.c.h.b16 %v91
    %v294 = vunpack.c.l.b16 %v92
    %v295 = vunpack.c.h.b16 %v92
    %v296 = vunpack.c.l.b16 %v93
    %v297 = vunpack.c.h.b16 %v93
    %v298 = vunpack.c.l.b16 %v94
    %v299 = vunpack.c.h.b16 %v94
    %v300 = vunpack.c.l.b16 %v95
    %v301 = vunpack.c.h.b16 %v95
    %v302 = vunpack.c.l.b16 %v96
    %v303 = vunpack.c.h.b16 %v96
    %v304 = vunpack.c.l.b16 %v97
    %v305 = vunpack.c.h.b16 %v97
    %v306 = vunpack.c.l.b16 %v98
    %v307 = vunpack.c.h.b16 %v98
    %v308 = vunpack.c.l.b16 %v99
    %v309 = vunpack.c.h.b16 %v99
    %v310 = vunpack.c.l.b16 %v100
    %v311 = vunpack.c.h.b16 %v100
    %v312 = vunpack.c.l.b16 %v101
    %v313 = vunpack.c.h.b16 %v101
    %v314 = vunpack.c.l.b16 %v102
    %v315 = vunpack.c.h.b16 %v102
    %v316 = vunpack.c.l.b16 %v103
    %v317 = vunpack.c.h.b16 %v103
    %v318 = vunpack.c.l.b16 %v104
    %v319 = vunpack.c.h.b16 %v104
    %v320 = vunpack.c.l.b16 %v105
    %v321 = vunpack.c.h.b16 %v105
    %v322 = vunpack.c.l.b16 %v106
    %v323 = vunpack.c.h.b16 %v106
    %v324 = vunpack.c.l.b16 %v107
    %v325 = vunpack.c.h.b16 %v107
    %v326 = vunpack.c.l.b16 %v108
    %v327 = vunpack.c.h.b16 %v108
    %v328 = vunpack.c.l.b16 %v109
    %v329 = vunpack.c.h.b16 %v109
    %v330 = vunpack.c.l.b16 %v110
    %v331 = vunpack.c.h.b16 %v110
    %v332 = vunpack.c.l.b16 %v111
    %v333 = vunpack.c.h.b16 %v111
    %v334 = vunpack.c.l.b16 %v112
    %v335 = vunpack.c.h.b16 %v112
    %v336 = vunpack.c.l.b16 %v113
    %v337 = vunpack.c.h.b16 %v113
    %v338 = vunpack.c.l.b16 %v114
    %v339 = vunpack.c.h.b16 %v114
    %v340 = vunpack.c.l.b16 %v115
    %v341 = vunpack.c.h.b16 %v115
    %v342 = vunpack.c.l.b16 %v116
    %v343 = vunpack.c.h.b16 %v116
    %v344 = vunpack.c.l.b16 %v117
    %v345 = vunpack.c.h.b16 %v117
    %v346 = vunpack.c.l.b16 %v118
    %v347 = vunpack.c.h.b16 %v118
    %v348 = vunpack.c.l.b16 %v119
    %v349 = vunpack.c.h.b16 %v119
    %v350 = vunpack.c.l.b16 %v120
    %v351 = vunpack.c.h.b16 %v120
    %v352 = vunpack.c.l.b16 %v121
    %v353 = vunpack.c.h.b16 %v121
    %v354 = vunpack.c.l.b16 %v122
    %v355 = vunpack.c.h.b16 %v122
    %v356 = vunpack.c.l.b16 %v123
    %v357 = vunpack.c.h.b16 %v123
    %v358 = vunpack.c.l.b16 %v124
    %v359 = vunpack.c.h.b16 %v124
    %v360 = vunpack.c.l.b16 %v125
    %v361 = vunpack.c.h.b16 %v125
    %v362 = vunpack.c.l.b16 %v126
    %v363 = vunpack.c.h.b16 %v126
    %v364 = vunpack.c.l.b16 %v127
    %v365 = vunpack.c.h.b16 %v127
    %v366 = vunpack.c.l.b16 %v128
    %v367 = vunpack.c.h.b16 %v128
    %v368 = vunpack.c.l.b16 %v129
    %v369 = vunpack.c.h.b16 %v129
    %v370 = vunpack.c.l.b16 %v130
    %v371 = vunpack.c.h.b16 %v130
    %v372 = vunpack.c.l.b16 %v131
    %v373 = vunpack.c.h.b16 %v131
    %v374 = vunpack.c.l.b16 %v132
    %v375 = vunpack.c.h.b16 %v132
    %v376 = vunpack.c.l.b16 %v133
    %v377 = vunpack.c.h.b16 %v133
    %v378 = vunpack.c.l.b16 %v134
    %v379 = vunpack.c.h.b16 %v134
    %v380 = vunpack.c.l.b16 %v135
    %v381 = vunpack.c.h.b16 %v135
    %v382 = vunpack.c.l.b16 %v136
    %v383 = vunpack.c.h.b16 %v136
    %v384 = vunpack.c.l.b16 %v137
    %v385 = vunpack.c.h.b16 %v137
    %v386 = vunpack.c.l.b16 %v138
    %v387 = vunpack.c.h.b16 %v138
    %v388 = vunpack.c.l.b16 %v139
    %v389 = vunpack.c.h.b16 %v139
    %v390 = vunpack.c.l.b16 %v140
    %v391 = vunpack.c.h.b16 %v140
    %v392 = vunpack.c.l.b16 %v141
    %v393 = vunpack.c.h.b16 %v141
    %v394 = vunpack.c.l.b16 %v142
    %v395 = vunpack.c.h.b16 %v142
    %v396 = vunpack.c.l.b16 %v143
    %v397 = vunpack.c.h.b16 %v143
    %v398 = vunpack.c.l.b16 %v144
    %v399 = vunpack.c.h.b16 %v144
    %v400 = vunpack.c.l.b16 %v145
    %v401 = vunpack.c.h.b16 %v145
    %v402 = vunpack.c.l.b16 %v146
    %v403 = vunpack.c.h.b16 %v146
    %v404 = vunpack.c.l.b16 %v147
    %v405 = vunpack.c.h.b16 %v147
    %v406 = vunpack.c.l.b16 %v148
    %v407 = vunpack.c.h.b16 %v148
    %v408 = vunpack.c.l.b16 %v149
    %v409 = vunpack.c.h.b16 %v149
    %v410 = vunpack.c.l.b16 %v150
    %v411 = vunpack.c.h.b16 %v150
    %v412 = vunpack.c.l.b16 %v151
    %v413 = vunpack.c.h.b16 %v151
    %v414 = vunpack.c.l.b16 %v152
    %v415 = vunpack.c.h.b16 %v152
    %v416 = vunpack.c.l.b16 %v153
    %v417 = vunpack.c.h.b16 %v153
    %v418 = vunpack.c.l.b16 %v154
    %v419 = vunpack.c.h.b16 %v154
    %v420 = vunpack.c.l.b16 %v155
    %v421 = vunpack.c.h.b16 %v155
    %v422 = vunpack.c.l.b16 %v156
    %v423 = vunpack.c.h.b16 %v156
    %v424 = vunpack.c.l.b16 %v157
    %v425 = vunpack.c.h.b16 %v157
    %v426 = vunpack.c.l.b16 %v158
    %v427 = vunpack.c.h.b16 %v158
    %v428 = vunpack.c.l.b16 %v159
    %v429 = vunpack.c.h.b16 %v159
    %v430 = vunpack.c.l.b16 %v160
    %v431 = vunpack.c.h.b16 %v160
    %v432 = vunpack.c.l.b16 %v161
    %v433 = vunpack.c.h.b16 %v161
    %v434 = vunpack.c.l.b16 %v162
    %v435 = vunpack.c.h.b16 %v162
    %v436 = vunpack.c.l.b16 %v163
    %v437 = vunpack.c.h.b16 %v163
    %v438 = vunpack.c.l.b16 %v164
    %v439 = vunpack.c.h.b16 %v164
    %v440 = vunpack.c.l.b16 %v165
    %v441 = vunpack.c.h.b16 %v165
    %v442 = vunpack.c.l.b16 %v166
    %v443 = vunpack.c.h.b16 %v166
    %v444 = vunpack.c.l.b16 %v167
    %v445 = vunpack.c.h.b16 %v167
    %v446 = vpack.c.b16 %v280, %v278
    %v447 = vpack.c.b16 %v281, %v279
    %v448 = vpack.c.b16 %v284, %v282
    %v449 = vpack.c.b16 %v285, %v283
    %v450 = vpack.c.b16 %v288, %v286
    %v451 = vpack.c.b16 %v289, %v287
    %v452 = vpack.c.b16 %v292, %v290
    %v453 = vpack.c.b16 %v293, %v291
    %v454 = vpack.c.b16 %v296, %v294
    %v455 = vpack.c.b16 %v297, %v295
    %v456 = vpack.c.b16 %v300, %v298
    %v457 = vpack.c.b16 %v301, %v299
    %v458 = vpack.c.b16 %v304, %v302
    %v459 = vpack.c.b16 %v305, %v303
    %v460 = vpack.c.b16 %v308, %v306
    %v461 = vpack.c.b16 %v309, %v307
    %v462 = vpack.c.b16 %v312, %v310
    %v463 = vpack.c.b16 %v313, %v311
    %v464 = vpack.c.b16 %v316, %v314
    %v465 = vpack.c.b16 %v317, %v315
    %v466 = vpack.c.b16 %v320, %v318
    %v467 = vpack.c.b16 %v321, %v319
    %v468 = vpack.c.b16 %v324, %v322
    %v469 = vpack.c.b16 %v325, %v323
    %v470 = vpack.c.b16 %v328, %v326
    %v471 = vpack.c.b16 %v329, %v327
    %v472 = vpack.c.b16 %v332, %v330
    %v473 = vpack.c.b16 %v333, %v331
    %v474 = vpack.c.b16 %v336, %v334
    %v475 = vpack.c.b16 %v337, %v335
    %v476 = vpack.c.b16 %v340, %v338
    %v477 = vpack.c.b16 %v341, %v339
    %v478 = vpack.c.b16 %v344, %v342
    %v479 = vpack.c.b16 %v345, %v343
    %v480 = vpack.c.b16 %v348, %v346
    %v481 = vpack.c.b16 %v349, %v347
    %v482 = vpack.c.b16 %v352, %v350
    %v483 = vpack.c.b16 %v353, %v351
    %v484 = vpack.c.b16 %v356, %v354
    %v485 = vpack.c.b16 %v357, %v355
    %v486 = vpack.c.b16 %v360, %v358
    %v487 = vpack.c.b16 %v361, %v359
    %v488 = vpack.c.b16 %v364, %v362
    %v489 = vpack.c.b16 %v365, %v363
    %v490 = vpack.c.b16 %v368, %v366
    %v491 = vpack.c.b16 %v369, %v367
    %v492 = vpack.c.b16 %v372, %v370
    %v493 = vpack.c.b16 %v373, %v371
    %v494 = vpack.c.b16 %v376, %v374
    %v495 = vpack.c.b16 %v377, %v375
    %v496 = vpack.c.b16 %v380, %v378
    %v497 = vpack.c.b16 %v381, %v379
    %v498 = vpack.c.b16 %v384, %v382
    %v499 = vpack.c.b16 %v385, %v383
    %v500 = vpack.c.b16 %v388, %v386
    %v501 = vpack.c.b16 %v389, %v387
    %v502 = vpack.c.b16 %v392, %v390
    %v503 = vpack.c.b16 %v393, %v391
    %v504 = vpack.c.b16 %v396, %v394
    %v505 = vpack.c.b16 %v397, %v395
    %v506 = vpack.c.b16 %v400, %v398
    %v507 = vpack.c.b16 %v401, %v399
    %v508 = vpack.c.b16 %v404, %v402
    %v509 = vpack.c.b16 %v405, %v403
    %v510 = vpack.c.b16 %v408, %v406
    %v511 = vpack.c.b16 %v409, %v407
    %v512 = vpack.c.b16 %v412, %v410
    %v513 = vpack.c.b16 %v413, %v411
    %v514 = vpack.c.b16 %v416, %v414
    %v515 = vpack.c.b16 %v417, %v415
    %v516 = vpack.c.b16 %v420, %v418
    %v517 = vpack.c.b16 %v421, %v419
    %v518 = vpack.c.b16 %v424, %v422
    %v519 = vpack.c.b16 %v425, %v423
    %v520 = vpack.c.b16 %v428, %v426
    %v521 = vpack.c.b16 %v429, %v427
    %v522 = vpack.c.b16 %v432, %v430
    %v523 = vpack.c.b16 %v433, %v431
    %v524 = vpack.c.b16 %v436, %v434
    %v525 = vpack.c.b16 %v437, %v435
    %v526 = vpack.c.b16 %v440, %v438
    %v527 = vpack.c.b16 %v441, %v439
    %v528 = vpack.c.b16 %v444, %v442
    %v529 = vpack.c.b16 %v445, %v443
    %vm612 = vcmask 228352
    %v614 = vsel %vm612, %v188, 0
    %vm616 = vcmask 1045504
    %v618 = vsel %vm616, %v528, 0
    %v621 = vsel %vm616, %v529, 0
    %623 = vmatpush.bf16.msra.mxu0 %v460
    %624 = vmatpush.bf16.msra.mxu0 %v458
    %625 = vmatpush.bf16.msra.mxu0 %v456
    %626 = vmatpush.bf16.msra.mxu0 %v454
    %627 = vmatpush.bf16.msra.mxu0 %v452
    %628 = vmatpush.bf16.msra.mxu0 %v450
    %629 = vmatpush.bf16.msra.mxu0 %v448
    %630 = vmatpush.bf16.msra.mxu0 %v446
    %631 = vmatmul.bf16.gmra.mxu0 %v183
    %v632 = vpop.f32.mrf.mxu0
    %v633 = vadd.f32 %v170, %v632
    %v634 = vpop.f32.mrf.mxu0
    %635 = vdwg.mxu0
    %636 = vmatpush.bf16.msra.mxu0 %v476
    %637 = vmatpush.bf16.msra.mxu0 %v474
    %638 = vmatpush.bf16.msra.mxu0 %v472
    %639 = vmatpush.bf16.msra.mxu0 %v470
    %640 = vmatpush.bf16.msra.mxu0 %v468
    %641 = vmatpush.bf16.msra.mxu0 %v466
    %642 = vmatpush.bf16.msra.mxu0 %v464
    %643 = vmatpush.bf16.msra.mxu0 %v462
    %644 = vmatmul.bf16.gmra.mxu0 %v184
    %v645 = vpop.f32.mrf.mxu0
    %v646 = vadd.f32 %v633, %v645
    %v647 = vpop.f32.mrf.mxu0
    %648 = vdwg.mxu0
    %649 = vmatpush.bf16.msra.mxu0 %v492
    %650 = vmatpush.bf16.msra.mxu0 %v490
    %651 = vmatpush.bf16.msra.mxu0 %v488
    %652 = vmatpush.bf16.msra.mxu0 %v486
    %653 = vmatpush.bf16.msra.mxu0 %v484
    %654 = vmatpush.bf16.msra.mxu0 %v482
    %655 = vmatpush.bf16.msra.mxu0 %v480
    %656 = vmatpush.bf16.msra.mxu0 %v478
    %657 = vmatmul.bf16.gmra.mxu0 %v185
    %v658 = vpop.f32.mrf.mxu0
    %v659 = vadd.f32 %v646, %v658
    %v660 = vpop.f32.mrf.mxu0
    %661 = vdwg.mxu0
    %662 = vmatpush.bf16.msra.mxu0 %v508
    %663 = vmatpush.bf16.msra.mxu0 %v506
    %664 = vmatpush.bf16.msra.mxu0 %v504
    %665 = vmatpush.bf16.msra.mxu0 %v502
    %666 = vmatpush.bf16.msra.mxu0 %v500
    %667 = vmatpush.bf16.msra.mxu0 %v498
    %668 = vmatpush.bf16.msra.mxu0 %v496
    %669 = vmatpush.bf16.msra.mxu0 %v494
    %670 = vmatmul.bf16.gmra.mxu0 %v186
    %v671 = vpop.f32.mrf.mxu0
    %v672 = vadd.f32 %v659, %v671
    %v673 = vpop.f32.mrf.mxu0
    %674 = vdwg.mxu0
    %675 = vmatpush.bf16.msra.mxu0 %v524
    %676 = vmatpush.bf16.msra.mxu0 %v522
    %677 = vmatpush.bf16.msra.mxu0 %v520
    %678 = vmatpush.bf16.msra.mxu0 %v518
    %679 = vmatpush.bf16.msra.mxu0 %v516
    %680 = vmatpush.bf16.msra.mxu0 %v514
    %681 = vmatpush.bf16.msra.mxu0 %v512
    %682 = vmatpush.bf16.msra.mxu0 %v510
    %683 = vmatmul.bf16.gmra.mxu0 %v187
    %v684 = vpop.f32.mrf.mxu0
    %v685 = vadd.f32 %v672, %v684
    %v686 = vpop.f32.mrf.mxu0
    %687 = vdwg.mxu0
    %688 = vmatpush.bf16.msra.mxu0 0
    %689 = vmatpush.bf16.msra.mxu0 0
    %690 = vmatpush.bf16.msra.mxu0 0
    %691 = vmatpush.bf16.msra.mxu0 0
    %692 = vmatpush.bf16.msra.mxu0 0
    %693 = vmatpush.bf16.msra.mxu0 0
    %694 = vmatpush.bf16.msra.mxu0 %v618
    %695 = vmatpush.bf16.msra.mxu0 %v526
    %696 = vmatmul.bf16.gmra.mxu0 %v614
    %v697 = vpop.f32.mrf.mxu0
    %v698 = vadd.f32 %v685, %v697
    %v699 = vpop.f32.mrf.mxu0
    %700 = vdwg.mxu0
    %701 = vmatpush.bf16.msra.mxu0 %v461
    %702 = vmatpush.bf16.msra.mxu0 %v459
    %703 = vmatpush.bf16.msra.mxu0 %v457
    %704 = vmatpush.bf16.msra.mxu0 %v455
    %705 = vmatpush.bf16.msra.mxu0 %v453
    %706 = vmatpush.bf16.msra.mxu0 %v451
    %707 = vmatpush.bf16.msra.mxu0 %v449
    %708 = vmatpush.bf16.msra.mxu0 %v447
    %709 = vmatmul.bf16.gmra.mxu0 %v183
    %v710 = vpop.f32.mrf.mxu0
    %v711 = vadd.f32 %v171, %v710
    %v712 = vpop.f32.mrf.mxu0
    %713 = vdwg.mxu0
    %714 = vmatpush.bf16.msra.mxu0 %v477
    %715 = vmatpush.bf16.msra.mxu0 %v475
    %716 = vmatpush.bf16.msra.mxu0 %v473
    %717 = vmatpush.bf16.msra.mxu0 %v471
    %718 = vmatpush.bf16.msra.mxu0 %v469
    %719 = vmatpush.bf16.msra.mxu0 %v467
    %720 = vmatpush.bf16.msra.mxu0 %v465
    %721 = vmatpush.bf16.msra.mxu0 %v463
    %722 = vmatmul.bf16.gmra.mxu0 %v184
    %v723 = vpop.f32.mrf.mxu0
    %v724 = vadd.f32 %v711, %v723
    %v725 = vpop.f32.mrf.mxu0
    %726 = vdwg.mxu0
    %727 = vmatpush.bf16.msra.mxu0 %v493
    %728 = vmatpush.bf16.msra.mxu0 %v491
    %729 = vmatpush.bf16.msra.mxu0 %v489
    %730 = vmatpush.bf16.msra.mxu0 %v487
    %731 = vmatpush.bf16.msra.mxu0 %v485
    %732 = vmatpush.bf16.msra.mxu0 %v483
    %733 = vmatpush.bf16.msra.mxu0 %v481
    %734 = vmatpush.bf16.msra.mxu0 %v479
    %735 = vmatmul.bf16.gmra.mxu0 %v185
    %v736 = vpop.f32.mrf.mxu0
    %v737 = vadd.f32 %v724, %v736
    %v738 = vpop.f32.mrf.mxu0
    %739 = vdwg.mxu0
    %740 = vmatpush.bf16.msra.mxu0 %v509
    %741 = vmatpush.bf16.msra.mxu0 %v507
    %742 = vmatpush.bf16.msra.mxu0 %v505
    %743 = vmatpush.bf16.msra.mxu0 %v503
    %744 = vmatpush.bf16.msra.mxu0 %v501
    %745 = vmatpush.bf16.msra.mxu0 %v499
    %746 = vmatpush.bf16.msra.mxu0 %v497
    %747 = vmatpush.bf16.msra.mxu0 %v495
    %748 = vmatmul.bf16.gmra.mxu0 %v186
    %v749 = vpop.f32.mrf.mxu0
    %v750 = vadd.f32 %v737, %v749
    %v751 = vpop.f32.mrf.mxu0
    %752 = vdwg.mxu0
    %753 = vmatpush.bf16.msra.mxu0 %v525
    %754 = vmatpush.bf16.msra.mxu0 %v523
    %755 = vmatpush.bf16.msra.mxu0 %v521
    %756 = vmatpush.bf16.msra.mxu0 %v519
    %757 = vmatpush.bf16.msra.mxu0 %v517
    %758 = vmatpush.bf16.msra.mxu0 %v515
    %759 = vmatpush.bf16.msra.mxu0 %v513
    %760 = vmatpush.bf16.msra.mxu0 %v511
    %761 = vmatmul.bf16.gmra.mxu0 %v187
    %v762 = vpop.f32.mrf.mxu0
    %v763 = vadd.f32 %v750, %v762
    %v764 = vpop.f32.mrf.mxu0
    %765 = vdwg.mxu0
    %766 = vmatpush.bf16.msra.mxu0 0
    %767 = vmatpush.bf16.msra.mxu0 0
    %768 = vmatpush.bf16.msra.mxu0 0
    %769 = vmatpush.bf16.msra.mxu0 0
    %770 = vmatpush.bf16.msra.mxu0 0
    %771 = vmatpush.bf16.msra.mxu0 0
    %772 = vmatpush.bf16.msra.mxu0 %v621
    %773 = vmatpush.bf16.msra.mxu0 %v527
    %774 = vmatmul.bf16.gmra.mxu0 %v614
    %v775 = vpop.f32.mrf.mxu0
    %v776 = vadd.f32 %v763, %v775
    %v777 = vpop.f32.mrf.mxu0
    %778 = vdwg.mxu0
    %v779 = vmax.f32 %v698, 0.0
    %v780 = vmax.f32 %v776, 0.0
    %v781 = vpack.c.bf16 %v779, %v779
    %v782 = vpack.c.bf16 %v780, %v780
    %v783 = vld [vmem:[#allocation8] sm:$0xf]
    %v784 = vld [vmem:[#allocation8 + $0x4] sm:$0xf]
    %v785 = vld [vmem:[#allocation8 + $0x8] sm:$0xf]
    %v786 = vld [vmem:[#allocation8 + $0xc] sm:$0xf]
    %v787 = vld [vmem:[#allocation8 + $0x10] sm:$0xf]
    %v788 = vld [vmem:[#allocation8 + $0x14] sm:$0xf]
    %v789 = vld [vmem:[#allocation8 + $0x18] sm:$0xf]
    %v790 = vld [vmem:[#allocation8 + $0x1c] sm:$0xf]
    %v791 = vld [vmem:[#allocation8 + $0x20] sm:$0xf]
    %v792 = vld [vmem:[#allocation8 + $0x24] sm:$0xf]
    %v793 = vld [vmem:[#allocation8 + $0x28] sm:$0xf]
    %v794 = vld [vmem:[#allocation8 + $0x2c] sm:$0xf]
    %v795 = vld [vmem:[#allocation8 + $0x30] sm:$0xf]
    %v796 = vld [vmem:[#allocation8 + $0x34] sm:$0xf]
    %v797 = vld [vmem:[#allocation8 + $0x38] sm:$0xf]
    %v798 = vld [vmem:[#allocation8 + $0x3c] sm:$0xf]
    %v799 = vld [vmem:[#allocation8 + $0x40] sm:$0xf]
    %v800 = vld [vmem:[#allocation8 + $0x44] sm:$0xf]
    %v801 = vld [vmem:[#allocation8 + $0x48] sm:$0xf]
    %v802 = vld [vmem:[#allocation8 + $0x4c] sm:$0xf]
    %v803 = vld [vmem:[#allocation8 + $0x50] sm:$0xf]
    %v804 = vld [vmem:[#allocation8 + $0x54] sm:$0xf]
    %v805 = vld [vmem:[#allocation8 + $0x58] sm:$0xf]
    %v806 = vld [vmem:[#allocation8 + $0x5c] sm:$0xf]
    %v807 = vld [vmem:[#allocation8 + $0x60] sm:$0xf]
    %v808 = vld [vmem:[#allocation8 + $0x64] sm:$0xf]
    %v809 = vld [vmem:[#allocation8 + $0x68] sm:$0xf]
    %v810 = vld [vmem:[#allocation8 + $0x6c] sm:$0xf]
    %v811 = vld [vmem:[#allocation8 + $0x70] sm:$0xf]
    %v812 = vld [vmem:[#allocation8 + $0x74] sm:$0xf]
    %v813 = vld [vmem:[#allocation8 + $0x78] sm:$0xf]
    %v814 = vld [vmem:[#allocation8 + $0x7c] sm:$0xf]
    %v815 = vld [vmem:[%s4] sm:$0x1]
    %v817 = vperm.slane %v815, 0
    %v851 = vunpack.c.l.b16 %v783
    %v852 = vunpack.c.l.b16 %v784
    %v853 = vunpack.c.l.b16 %v785
    %v854 = vunpack.c.l.b16 %v786
    %v855 = vunpack.c.l.b16 %v787
    %v856 = vunpack.c.l.b16 %v788
    %v857 = vunpack.c.l.b16 %v789
    %v858 = vunpack.c.l.b16 %v790
    %v859 = vunpack.c.l.b16 %v791
    %v860 = vunpack.c.l.b16 %v792
    %v861 = vunpack.c.l.b16 %v793
    %v862 = vunpack.c.l.b16 %v794
    %v863 = vunpack.c.l.b16 %v795
    %v864 = vunpack.c.l.b16 %v796
    %v865 = vunpack.c.l.b16 %v797
    %v866 = vunpack.c.l.b16 %v798
    %v867 = vunpack.c.l.b16 %v799
    %v868 = vunpack.c.l.b16 %v800
    %v869 = vunpack.c.l.b16 %v801
    %v870 = vunpack.c.l.b16 %v802
    %v871 = vunpack.c.l.b16 %v803
    %v872 = vunpack.c.l.b16 %v804
    %v873 = vunpack.c.l.b16 %v805
    %v874 = vunpack.c.l.b16 %v806
    %v875 = vunpack.c.l.b16 %v807
    %v876 = vunpack.c.l.b16 %v808
    %v877 = vunpack.c.l.b16 %v809
    %v878 = vunpack.c.l.b16 %v810
    %v879 = vunpack.c.l.b16 %v811
    %v880 = vunpack.c.l.b16 %v812
    %v881 = vunpack.c.l.b16 %v813
    %v882 = vunpack.c.l.b16 %v814
    %v883 = vpack.c.b16 %v852, %v851
    %v884 = vpack.c.b16 %v854, %v853
    %v885 = vpack.c.b16 %v856, %v855
    %v886 = vpack.c.b16 %v858, %v857
    %v887 = vpack.c.b16 %v860, %v859
    %v888 = vpack.c.b16 %v862, %v861
    %v889 = vpack.c.b16 %v864, %v863
    %v890 = vpack.c.b16 %v866, %v865
    %v891 = vpack.c.b16 %v868, %v867
    %v892 = vpack.c.b16 %v870, %v869
    %v893 = vpack.c.b16 %v872, %v871
    %v894 = vpack.c.b16 %v874, %v873
    %v895 = vpack.c.b16 %v876, %v875
    %v896 = vpack.c.b16 %v878, %v877
    %v897 = vpack.c.b16 %v880, %v879
    %v898 = vpack.c.b16 %v882, %v881
    %915 = vmatpush.bf16.msra.mxu0 %v890
    %916 = vmatpush.bf16.msra.mxu0 %v889
    %917 = vmatpush.bf16.msra.mxu0 %v888
    %918 = vmatpush.bf16.msra.mxu0 %v887
    %919 = vmatpush.bf16.msra.mxu0 %v886
    %920 = vmatpush.bf16.msra.mxu0 %v885
    %921 = vmatpush.bf16.msra.mxu0 %v884
    %922 = vmatpush.bf16.msra.mxu0 %v883
    %923 = vmatmul.bf16.gmra.mxu0 %v781
    %v924 = vpop.f32.mrf.mxu0
    %v925 = vadd.f32 %v817, %v924
    %v926 = vpop.f32.mrf.mxu0
    %927 = vdwg.mxu0
    %928 = vmatpush.bf16.msra.mxu0 %v898
    %929 = vmatpush.bf16.msra.mxu0 %v897
    %930 = vmatpush.bf16.msra.mxu0 %v896
    %931 = vmatpush.bf16.msra.mxu0 %v895
    %932 = vmatpush.bf16.msra.mxu0 %v894
    %933 = vmatpush.bf16.msra.mxu0 %v893
    %934 = vmatpush.bf16.msra.mxu0 %v892
    %935 = vmatpush.bf16.msra.mxu0 %v891
    %936 = vmatmul.bf16.gmra.mxu0 %v782
    %v937 = vpop.f32.mrf.mxu0
    %v938 = vadd.f32 %v925, %v937
    %v939 = vpop.f32.mrf.mxu0
    %940 = vdwg.mxu0
    %941 = vmax.xlane.f32.xlu0 %v938
    %v942 = vpop.xlane.xlu0 %941
    %v943 = vsub.f32 %v938, %v942
    %v944 = vmul.f32 %v943, 1.442695
    %v945 = vpow.pop %v944
    %946 = vadd.xlane.f32.xlu0 %v945
    %v947 = vpop.xlane.xlu0 %946
    %v948 = vrcp.pop %v947
    %v949 = vmul.f32 %v947, %v948
    %v950 = vsub.f32 1.0, %v949
    %v951 = vmul.f32 %v948, %v950
    %v952 = vadd.f32 %v948, %v951
    %vm953 = vweird.f32 %v947
    %vm954 = vweird.f32 %v948
    %vm955 = vmor %vm953, %vm954
    %v956 = vsel %vm955, %v948, %v952
    %v957 = vand.u32 2147483647, %v947
    %vm958 = vcmp.eq.f32.partialorder %v957, 8.507059e+37
    %v959 = vand.u32 %v947, 2147483648
    %v960 = vor.u32 1.1754944e-38, %v959
    %v961 = vsel %vm958, %v960, %v956
    %v962 = vmul.f32 %v945, %v961
    %963 = vst [vmem:[#allocation10] sm:$0xff] %v962
    // Predicated region
    $region38: #{tpu_custom_call.1} parent=1 // pred_check
      _
    $region39: #{tpu_custom_call.1} parent=1 // pred_check_branch
      %965 = sbr.rel (0) target = $region41
    $region40: #{tpu_custom_call.1} parent=1 // pred_region
      %967 = vsyncadd [#allocation4], 0
      %s969 = sshll.u32 [#allocation10], 4
      %s970 = int_to_ptr.vmem [resolvable:$true] %s969
      %s971 = sshll.u32 %s5, 4
      %s972 = int_to_ptr.hbm [resolvable:$true] %s971
      %974 = dma.vmem_to_hbm [thread:$0]  %s970, 128, %s972, [#allocation4]
    $region41: #{tpu_custom_call.1} parent=1 // pred_fallthru
      _
    // Predicated region
    $region42: #{tpu_custom_call.1} parent=1 // pred_check
      _
    $region43: #{tpu_custom_call.1} parent=1 // pred_check_branch
      %976 = sbr.rel (0) target = $region45
    $region44: #{tpu_custom_call.1} parent=1 // pred_region
      %978 = dma.done [#allocation4], 128
    $region45: #{tpu_custom_call.1} parent=1 // pred_fallthru
      _
    %979 = vsyncpa [#allocation3], 1
    %980 = vsyncpa [#allocation6], 1
    %981 = vsyncpa [#allocation9], 1
    %982 = vsyncpa [#allocation4], 1

</llo_original>
